<compile_context>
chip_gen: v5e
topology: v5e:2x2
jax: 0.10.0
libtpu: 0.0.40
codegen_flags: <defaults>
</compile_context>

<pallas_src>
import jax
import jax.numpy as jnp
from jax.experimental import pallas as pl
from jax.experimental.pallas import tpu as pltpu


def _denoiser_kernel(sigma_ref, x_ref, w_ref, b_ref, g_ref, o_ref):
    """One grid step = NB frames.  x/o blocks: (C, NB, P), sublanes=frames, lanes=HW."""
    C = x_ref.shape[0]

    # --- DenoiserScaling (VScalingWithEDMcNoise), per-frame, computed in-kernel ---
    sv = sigma_ref[...]                       # (NB, 1) f32
    s2 = sv * sv + 1.0
    c_in = jax.lax.rsqrt(s2)                  # 1/sqrt(sigma^2+1)
    c_skip = 1.0 / s2                         # 1/(sigma^2+1)
    c_out = -sv * c_in                        # -sigma/sqrt(sigma^2+1)
    c_noise = 0.25 * jnp.log(sv)              # 0.25*log(sigma)

    # Per-channel (NB, P) planes: full 8-sublane x 128-lane vregs, f32 math on-chip.
    xs = [x_ref[c].astype(jnp.float32) for c in range(C)]
    zs = [xc * c_in for xc in xs]             # network input: x * c_in

    # --- network(x*c_in, c_noise): 1x1-conv channel mix on the VPU.  C is tiny,
    # so 16 broadcast FMAs with SMEM scalar weights beat a padded MXU matmul. ---
    for o in range(C):
        acc = w_ref[o, 0] * zs[0]
        for c in range(1, C):
            acc = acc + w_ref[o, c] * zs[c]
        y = acc + b_ref[o] + g_ref[o] * c_noise                  # noise-conditioned bias
        # --- denoiser epilogue: out = net_out * c_out + input * c_skip ---
        o_ref[o] = (y * c_out + xs[o] * c_skip).astype(o_ref.dtype)


def _pick_block_frames(n, c, p, itemsize, budget_bytes=20 << 20):
    """Frames per grid step: multiple of 8 (full f32 sublanes), sized so the
    double-buffered in/out tiles plus f32 temporaries stay within budget, and
    preferring a grid length >= 2 (keeps both v7x TensorCores busy)."""
    if n <= 8:
        return n
    per_frame = c * p * (4 * itemsize + 3 * 4)       # 2x in + 2x out bufs + f32 temps
    cap = max(8, min(n, budget_bytes // per_frame) // 8 * 8)
    best = None
    for nb in range(8, cap + 1, 8):
        if n % nb == 0 and (n // nb >= 2 or best is None):
            best = nb                                 # largest clean divisor, grid >= 2
    if best is not None:
        return best
    return n if n <= cap else cap                     # ragged last block via cdiv grid


def denoiser_temporal_multidiffusion(
        x, sigma, *, w, b, gamma,
        num_overlap_frames, num_frames, n_skips,
        chunk_size=None, cond=None, is_dub=False):
    """JAX/Pallas equivalent of DenoiserTemporalMultiDiffusion.forward."""
    cond = {} if cond is None else cond

    # Normalize to the internal 5D (B, C, T, H, W) video-segment layout.
    if x.ndim == 5:
        B, C, T, H, W = x.shape
    else:
        T = num_frames
        N0, C, H, W = x.shape
        B = N0 // T
        x = jnp.transpose(x.reshape(B, T, C, H, W), (0, 2, 1, 3, 4))
    N = B * T
    if sigma.shape[0] != N:
        sigma = jnp.repeat(sigma, T)                  # 'b -> (b t)'
    n_skips_eff = n_skips * N // T                    # torch: n_skips * input.shape[0] // T

    # is_dub: blend ground-truth through masks before denoising (elementwise glue).
    masks4 = gt4 = None
    if is_dub:
        masks = cond["masks"]
        gt = cond.get("gt", jnp.zeros_like(x))

        def _to5(v):
            if v.ndim == 5:
                return v
            return jnp.transpose(v.reshape(B, T, C, H, W), (0, 2, 1, 3, 4))

        m5, gt5 = _to5(masks), _to5(gt)
        x = x * m5 + gt5 * (1.0 - m5)
        masks4 = jnp.transpose(m5, (0, 2, 1, 3, 4)).reshape(N, C, H, W)
        gt4 = jnp.transpose(gt5, (0, 2, 1, 3, 4)).reshape(N, C, H, W)

    # Temporal multi-diffusion overlap averaging: one vectorized gather+scatter
    # instead of the original sequential O(B) dynamic-update-slice loop.
    P = H * W
    xp = x.reshape(B, C, T, P)                        # free: merges the two minor dims
    K = num_overlap_frames
    L = B - n_skips_eff                               # loop trip count of the torch loop
    if L > 0 and K > 0:
        # TODO(synk): if n_skips_eff >= 2 and L > n_skips_eff - 1 the sequential torch
        # loop has cross-iteration read-after-write chains this one-shot form ignores;
        # that regime is unreachable for integer n_skips >= 1 (then L <= 0).
        avg = 0.5 * (xp[:L, :, T - K:] + xp[1:L + 1, :, :K])
        xp = xp.at[:L, :, T - K:].set(avg)
        xp = xp.at[n_skips_eff:n_skips_eff + L, :, :K].set(avg)

    if chunk_size is not None:
        assert chunk_size % num_frames == 0, "Chunk size should be multiple of num_frames"
        # chunk_network is subsumed by the Pallas grid (stateless per-frame net).
    # TODO(synk): tensor-valued additional_model_inputs (the repeat-to-chunk logic
    # inside chunk_network) are not consumed by the synthetic stand-in network.

    # --- Pallas hot path: channels-major (C, N, P) layout, NB frames per grid step ---
    io_dtype = x.dtype
    x_cnp = jnp.transpose(xp, (1, 0, 2, 3)).reshape(C, N, P)
    sig2 = sigma.reshape(N, 1).astype(jnp.float32)
    w_s = jnp.asarray(w, jnp.float32).reshape(C, C)
    b_s = jnp.asarray(b, jnp.float32).reshape(C)
    g_s = jnp.asarray(gamma, jnp.float32).reshape(C)

    NB = _pick_block_frames(N, C, P, x_cnp.dtype.itemsize)
    grid = (pl.cdiv(N, NB),)

    out_cnp = pl.pallas_call(
        _denoiser_kernel,
        grid=grid,
        in_specs=[
            pl.BlockSpec((NB, 1), lambda i: (i, 0)),               # sigma, per frame
            pl.BlockSpec((C, NB, P), lambda i: (0, i, 0)),         # NB frames / step
            pl.BlockSpec(memory_space=pltpu.MemorySpace.SMEM),     # W (1x1 conv weight)
            pl.BlockSpec(memory_space=pltpu.MemorySpace.SMEM),     # b
            pl.BlockSpec(memory_space=pltpu.MemorySpace.SMEM),     # gamma (c_noise cond)
        ],
        out_specs=pl.BlockSpec((C, NB, P), lambda i: (0, i, 0)),
        out_shape=jax.ShapeDtypeStruct((C, N, P), io_dtype),
        compiler_params=pltpu.CompilerParams(
            dimension_semantics=("parallel",),
            vmem_limit_bytes=32 * 1024 * 1024),
    )(sig2, x_cnp, w_s, b_s, g_s)

    # Back to the module's (B*T, C, H, W) output layout.
    out = jnp.transpose(out_cnp, (1, 0, 2)).reshape(N, C, H, W)

    # is_dub: re-blend after denoising.
    if is_dub:
        out = out * masks4 + gt4 * (1.0 - masks4)
    return out


def _reference(x5, sigma, w, b, gamma, num_overlap_frames, num_frames, n_skips):
    """Pure-JAX reference of the same forward semantics (sequential averaging loop)."""
    B, C, T, H, W = x5.shape
    x = jnp.transpose(x5, (0, 2, 1, 3, 4)).reshape(B * T, C, H, W)
    sig = jnp.repeat(sigma, T) if sigma.shape[0] != B * T else sigma
    ns = n_skips * (B * T) // T
    xx = jnp.transpose(x.reshape(B, T, C, H, W), (0, 2, 1, 3, 4))
    for i in range(B - ns):
        avg = 0.5 * (xx[i, :, T - num_overlap_frames:]
                     + xx[i + 1, :, :num_overlap_frames])
        xx = xx.at[i, :, T - num_overlap_frames:].set(avg)
        xx = xx.at[i + ns, :, :num_overlap_frames].set(avg)
    x = jnp.transpose(xx, (0, 2, 1, 3, 4)).reshape(B * T, C, H, W)
    s = sig.reshape(-1, 1, 1, 1)
    c_skip = 1.0 / (s * s + 1.0)
    c_in = 1.0 / jnp.sqrt(s * s + 1.0)
    c_out = -s * c_in
    c_noise = 0.25 * jnp.log(s)
    z = x * c_in
    y = (jnp.einsum("oc,nchw->nohw", w, z)
         + b.reshape(1, C, 1, 1)
         + gamma.reshape(1, C, 1, 1) * c_noise)
    return y * c_out + x * c_skip


if __name__ == "__main__":
    key = jax.random.PRNGKey(0)
    kx, ks, kw, kb, kg = jax.random.split(key, 5)

    # Small shapes consistent with the module: (B, C, T, H, W) video segments.
    B, C, T, H, W = 2, 4, 8, 16, 16
    x = jax.random.normal(kx, (B, C, T, H, W), jnp.float32)
    sigma = jax.random.uniform(ks, (B,), jnp.float32, 0.3, 3.0)   # noise level per segment

    # Deterministic synthetic "network" parameters (1x1 conv + noise-conditioned bias).
    w = jax.random.normal(kw, (C, C), jnp.float32) * 0.5
    b = jax.random.normal(kb, (C,), jnp.float32) * 0.1
    gamma = jax.random.normal(kg, (C,), jnp.float32) * 0.1

    out = denoiser_temporal_multidiffusion(
        x, sigma, w=w, b=b, gamma=gamma,
        num_overlap_frames=1, num_frames=T, n_skips=1, chunk_size=T)
    out = jax.block_until_ready(out)

    ref = _reference(x, sigma, w, b, gamma, 1, T, 1)
    assert out.shape == (B * T, C, H, W), out.shape
    assert out.dtype == x.dtype, out.dtype
    err = float(jnp.max(jnp.abs(out - ref)))
    assert jnp.allclose(out, ref, rtol=1e-5, atol=1e-4), f"max abs err = {err}"
    print("KERNEL_OK")
</pallas_src>

<mosaic_0001>
module attributes {stable_mosaic.version = 11 : i64} {
  func.func @_denoiser_kernel(%arg0: i32, %arg1: memref<8x1xf32, #tpu.memory_space<vmem>>, %arg2: memref<4x8x256xf32, #tpu.memory_space<vmem>>, %arg3: memref<4x4xf32, #tpu.memory_space<smem>>, %arg4: memref<4xf32, #tpu.memory_space<smem>>, %arg5: memref<4xf32, #tpu.memory_space<smem>>, %arg6: memref<4x8x256xf32, #tpu.memory_space<vmem>>) attributes {dimension_semantics = [#tpu.dimension_semantics<parallel>], iteration_bounds = array<i64: 2>, scalar_prefetch = 0 : i64, scratch_operands = 0 : i64, tpu.core_type = #tpu.core_type<tc>, window_params = [{transform_indices = @transform_0, window_bounds = array<i64: 8, 1>}, {transform_indices = @transform_1, window_bounds = array<i64: 4, 8, 256>}, {transform_indices = @transform_2, window_bounds = array<i64: 4, 4>}, {transform_indices = @transform_3, window_bounds = array<i64: 4>}, {transform_indices = @transform_4, window_bounds = array<i64: 4>}, {transform_indices = @transform_5, window_bounds = array<i64: 4, 8, 256>}]} {
    %c0 = arith.constant 0 : index
    %c0_0 = arith.constant 0 : index
    %0 = vector.load %arg1[%c0, %c0_0] : memref<8x1xf32, #tpu.memory_space<vmem>>, vector<8x1xf32>
    %1 = arith.mulf %0, %0 : vector<8x1xf32>
    %cst = arith.constant 1.000000e+00 : f32
    %2 = vector.broadcast %cst : f32 to vector<8x1xf32>
    %3 = arith.addf %1, %2 : vector<8x1xf32>
    %4 = math.rsqrt %3 : vector<8x1xf32>
    %cst_1 = arith.constant 1.000000e+00 : f32
    %5 = vector.broadcast %cst_1 : f32 to vector<8x1xf32>
    %6 = arith.divf %5, %3 : vector<8x1xf32>
    %cst_2 = arith.constant 0.000000e+00 : f32
    %7 = vector.broadcast %cst_2 : f32 to vector<8x1xf32>
    %8 = arith.subf %7, %0 : vector<8x1xf32>
    %9 = arith.mulf %8, %4 : vector<8x1xf32>
    %10 = math.log %0 : vector<8x1xf32>
    %cst_3 = arith.constant 2.500000e-01 : f32
    %11 = vector.broadcast %cst_3 : f32 to vector<8x1xf32>
    %12 = arith.mulf %11, %10 : vector<8x1xf32>
    %c0_4 = arith.constant 0 : index
    %c0_5 = arith.constant 0 : index
    %c0_6 = arith.constant 0 : index
    %13 = vector.load %arg2[%c0_4, %c0_5, %c0_6] : memref<4x8x256xf32, #tpu.memory_space<vmem>>, vector<1x8x256xf32>
    %14 = vector.shape_cast %13 : vector<1x8x256xf32> to vector<8x256xf32>
    %c1 = arith.constant 1 : index
    %c0_7 = arith.constant 0 : index
    %c0_8 = arith.constant 0 : index
    %15 = vector.load %arg2[%c1, %c0_7, %c0_8] : memref<4x8x256xf32, #tpu.memory_space<vmem>>, vector<1x8x256xf32>
    %16 = vector.shape_cast %15 : vector<1x8x256xf32> to vector<8x256xf32>
    %c2 = arith.constant 2 : index
    %c0_9 = arith.constant 0 : index
    %c0_10 = arith.constant 0 : index
    %17 = vector.load %arg2[%c2, %c0_9, %c0_10] : memref<4x8x256xf32, #tpu.memory_space<vmem>>, vector<1x8x256xf32>
    %18 = vector.shape_cast %17 : vector<1x8x256xf32> to vector<8x256xf32>
    %c3 = arith.constant 3 : index
    %c0_11 = arith.constant 0 : index
    %c0_12 = arith.constant 0 : index
    %19 = vector.load %arg2[%c3, %c0_11, %c0_12] : memref<4x8x256xf32, #tpu.memory_space<vmem>>, vector<1x8x256xf32>
    %20 = vector.shape_cast %19 : vector<1x8x256xf32> to vector<8x256xf32>
    %21 = vector.broadcast %4 : vector<8x1xf32> to vector<8x256xf32>
    %22 = arith.mulf %14, %21 : vector<8x256xf32>
    %23 = vector.broadcast %4 : vector<8x1xf32> to vector<8x256xf32>
    %24 = arith.mulf %16, %23 : vector<8x256xf32>
    %25 = vector.broadcast %4 : vector<8x1xf32> to vector<8x256xf32>
    %26 = arith.mulf %18, %25 : vector<8x256xf32>
    %27 = vector.broadcast %4 : vector<8x1xf32> to vector<8x256xf32>
    %28 = arith.mulf %20, %27 : vector<8x256xf32>
    %c0_13 = arith.constant 0 : index
    %c0_14 = arith.constant 0 : index
    %29 = memref.load %arg3[%c0_13, %c0_14] : memref<4x4xf32, #tpu.memory_space<smem>>
    %30 = vector.broadcast %29 : f32 to vector<8x256xf32>
    %31 = arith.mulf %30, %22 : vector<8x256xf32>
    %c0_15 = arith.constant 0 : index
    %c1_16 = arith.constant 1 : index
    %32 = memref.load %arg3[%c0_15, %c1_16] : memref<4x4xf32, #tpu.memory_space<smem>>
    %33 = vector.broadcast %32 : f32 to vector<8x256xf32>
    %34 = arith.mulf %33, %24 : vector<8x256xf32>
    %35 = arith.addf %31, %34 : vector<8x256xf32>
    %c0_17 = arith.constant 0 : index
    %c2_18 = arith.constant 2 : index
    %36 = memref.load %arg3[%c0_17, %c2_18] : memref<4x4xf32, #tpu.memory_space<smem>>
    %37 = vector.broadcast %36 : f32 to vector<8x256xf32>
    %38 = arith.mulf %37, %26 : vector<8x256xf32>
    %39 = arith.addf %35, %38 : vector<8x256xf32>
    %c0_19 = arith.constant 0 : index
    %c3_20 = arith.constant 3 : index
    %40 = memref.load %arg3[%c0_19, %c3_20] : memref<4x4xf32, #tpu.memory_space<smem>>
    %41 = vector.broadcast %40 : f32 to vector<8x256xf32>
    %42 = arith.mulf %41, %28 : vector<8x256xf32>
    %43 = arith.addf %39, %42 : vector<8x256xf32>
    %c0_21 = arith.constant 0 : index
    %44 = memref.load %arg4[%c0_21] : memref<4xf32, #tpu.memory_space<smem>>
    %45 = vector.broadcast %44 : f32 to vector<8x256xf32>
    %46 = arith.addf %43, %45 : vector<8x256xf32>
    %c0_22 = arith.constant 0 : index
    %47 = memref.load %arg5[%c0_22] : memref<4xf32, #tpu.memory_space<smem>>
    %48 = vector.broadcast %47 : f32 to vector<8x1xf32>
    %49 = arith.mulf %48, %12 : vector<8x1xf32>
    %50 = vector.broadcast %49 : vector<8x1xf32> to vector<8x256xf32>
    %51 = arith.addf %46, %50 : vector<8x256xf32>
    %52 = vector.broadcast %9 : vector<8x1xf32> to vector<8x256xf32>
    %53 = arith.mulf %51, %52 : vector<8x256xf32>
    %54 = vector.broadcast %6 : vector<8x1xf32> to vector<8x256xf32>
    %55 = arith.mulf %14, %54 : vector<8x256xf32>
    %56 = arith.addf %53, %55 : vector<8x256xf32>
    %c0_23 = arith.constant 0 : index
    %c0_24 = arith.constant 0 : index
    %c0_25 = arith.constant 0 : index
    %57 = vector.load %arg6[%c0_23, %c0_24, %c0_25] : memref<4x8x256xf32, #tpu.memory_space<vmem>>, vector<1x8x256xf32>
    %58 = vector.shape_cast %57 : vector<1x8x256xf32> to vector<8x256xf32>
    %59 = vector.shape_cast %56 : vector<8x256xf32> to vector<1x8x256xf32>
    tpu.vector_store %arg6[%c0_23, %c0_24, %c0_25], %59 {strides = array<i32>} : memref<4x8x256xf32, #tpu.memory_space<vmem>>, vector<1x8x256xf32>,
    %c1_26 = arith.constant 1 : index
    %c0_27 = arith.constant 0 : index
    %60 = memref.load %arg3[%c1_26, %c0_27] : memref<4x4xf32, #tpu.memory_space<smem>>
    %61 = vector.broadcast %60 : f32 to vector<8x256xf32>
    %62 = arith.mulf %61, %22 : vector<8x256xf32>
    %c1_28 = arith.constant 1 : index
    %c1_29 = arith.constant 1 : index
    %63 = memref.load %arg3[%c1_28, %c1_29] : memref<4x4xf32, #tpu.memory_space<smem>>
    %64 = vector.broadcast %63 : f32 to vector<8x256xf32>
    %65 = arith.mulf %64, %24 : vector<8x256xf32>
    %66 = arith.addf %62, %65 : vector<8x256xf32>
    %c1_30 = arith.constant 1 : index
    %c2_31 = arith.constant 2 : index
    %67 = memref.load %arg3[%c1_30, %c2_31] : memref<4x4xf32, #tpu.memory_space<smem>>
    %68 = vector.broadcast %67 : f32 to vector<8x256xf32>
    %69 = arith.mulf %68, %26 : vector<8x256xf32>
    %70 = arith.addf %66, %69 : vector<8x256xf32>
    %c1_32 = arith.constant 1 : index
    %c3_33 = arith.constant 3 : index
    %71 = memref.load %arg3[%c1_32, %c3_33] : memref<4x4xf32, #tpu.memory_space<smem>>
    %72 = vector.broadcast %71 : f32 to vector<8x256xf32>
    %73 = arith.mulf %72, %28 : vector<8x256xf32>
    %74 = arith.addf %70, %73 : vector<8x256xf32>
    %c1_34 = arith.constant 1 : index
    %75 = memref.load %arg4[%c1_34] : memref<4xf32, #tpu.memory_space<smem>>
    %76 = vector.broadcast %75 : f32 to vector<8x256xf32>
    %77 = arith.addf %74, %76 : vector<8x256xf32>
    %c1_35 = arith.constant 1 : index
    %78 = memref.load %arg5[%c1_35] : memref<4xf32, #tpu.memory_space<smem>>
    %79 = vector.broadcast %78 : f32 to vector<8x1xf32>
    %80 = arith.mulf %79, %12 : vector<8x1xf32>
    %81 = vector.broadcast %80 : vector<8x1xf32> to vector<8x256xf32>
    %82 = arith.addf %77, %81 : vector<8x256xf32>
    %83 = vector.broadcast %9 : vector<8x1xf32> to vector<8x256xf32>
    %84 = arith.mulf %82, %83 : vector<8x256xf32>
    %85 = vector.broadcast %6 : vector<8x1xf32> to vector<8x256xf32>
    %86 = arith.mulf %16, %85 : vector<8x256xf32>
    %87 = arith.addf %84, %86 : vector<8x256xf32>
    %c1_36 = arith.constant 1 : index
    %c0_37 = arith.constant 0 : index
    %c0_38 = arith.constant 0 : index
    %88 = vector.load %arg6[%c1_36, %c0_37, %c0_38] : memref<4x8x256xf32, #tpu.memory_space<vmem>>, vector<1x8x256xf32>
    %89 = vector.shape_cast %88 : vector<1x8x256xf32> to vector<8x256xf32>
    %90 = vector.shape_cast %87 : vector<8x256xf32> to vector<1x8x256xf32>
    tpu.vector_store %arg6[%c1_36, %c0_37, %c0_38], %90 {strides = array<i32>} : memref<4x8x256xf32, #tpu.memory_space<vmem>>, vector<1x8x256xf32>,
    %c2_39 = arith.constant 2 : index
    %c0_40 = arith.constant 0 : index
    %91 = memref.load %arg3[%c2_39, %c0_40] : memref<4x4xf32, #tpu.memory_space<smem>>
    %92 = vector.broadcast %91 : f32 to vector<8x256xf32>
    %93 = arith.mulf %92, %22 : vector<8x256xf32>
    %c2_41 = arith.constant 2 : index
    %c1_42 = arith.constant 1 : index
    %94 = memref.load %arg3[%c2_41, %c1_42] : memref<4x4xf32, #tpu.memory_space<smem>>
    %95 = vector.broadcast %94 : f32 to vector<8x256xf32>
    %96 = arith.mulf %95, %24 : vector<8x256xf32>
    %97 = arith.addf %93, %96 : vector<8x256xf32>
    %c2_43 = arith.constant 2 : index
    %c2_44 = arith.constant 2 : index
    %98 = memref.load %arg3[%c2_43, %c2_44] : memref<4x4xf32, #tpu.memory_space<smem>>
    %99 = vector.broadcast %98 : f32 to vector<8x256xf32>
    %100 = arith.mulf %99, %26 : vector<8x256xf32>
    %101 = arith.addf %97, %100 : vector<8x256xf32>
    %c2_45 = arith.constant 2 : index
    %c3_46 = arith.constant 3 : index
    %102 = memref.load %arg3[%c2_45, %c3_46] : memref<4x4xf32, #tpu.memory_space<smem>>
    %103 = vector.broadcast %102 : f32 to vector<8x256xf32>
    %104 = arith.mulf %103, %28 : vector<8x256xf32>
    %105 = arith.addf %101, %104 : vector<8x256xf32>
    %c2_47 = arith.constant 2 : index
    %106 = memref.load %arg4[%c2_47] : memref<4xf32, #tpu.memory_space<smem>>
    %107 = vector.broadcast %106 : f32 to vector<8x256xf32>
    %108 = arith.addf %105, %107 : vector<8x256xf32>
    %c2_48 = arith.constant 2 : index
    %109 = memref.load %arg5[%c2_48] : memref<4xf32, #tpu.memory_space<smem>>
    %110 = vector.broadcast %109 : f32 to vector<8x1xf32>
    %111 = arith.mulf %110, %12 : vector<8x1xf32>
    %112 = vector.broadcast %111 : vector<8x1xf32> to vector<8x256xf32>
    %113 = arith.addf %108, %112 : vector<8x256xf32>
    %114 = vector.broadcast %9 : vector<8x1xf32> to vector<8x256xf32>
    %115 = arith.mulf %113, %114 : vector<8x256xf32>
    %116 = vector.broadcast %6 : vector<8x1xf32> to vector<8x256xf32>
    %117 = arith.mulf %18, %116 : vector<8x256xf32>
    %118 = arith.addf %115, %117 : vector<8x256xf32>
    %c2_49 = arith.constant 2 : index
    %c0_50 = arith.constant 0 : index
    %c0_51 = arith.constant 0 : index
    %119 = vector.load %arg6[%c2_49, %c0_50, %c0_51] : memref<4x8x256xf32, #tpu.memory_space<vmem>>, vector<1x8x256xf32>
    %120 = vector.shape_cast %119 : vector<1x8x256xf32> to vector<8x256xf32>
    %121 = vector.shape_cast %118 : vector<8x256xf32> to vector<1x8x256xf32>
    tpu.vector_store %arg6[%c2_49, %c0_50, %c0_51], %121 {strides = array<i32>} : memref<4x8x256xf32, #tpu.memory_space<vmem>>, vector<1x8x256xf32>,
    %c3_52 = arith.constant 3 : index
    %c0_53 = arith.constant 0 : index
    %122 = memref.load %arg3[%c3_52, %c0_53] : memref<4x4xf32, #tpu.memory_space<smem>>
    %123 = vector.broadcast %122 : f32 to vector<8x256xf32>
    %124 = arith.mulf %123, %22 : vector<8x256xf32>
    %c3_54 = arith.constant 3 : index
    %c1_55 = arith.constant 1 : index
    %125 = memref.load %arg3[%c3_54, %c1_55] : memref<4x4xf32, #tpu.memory_space<smem>>
    %126 = vector.broadcast %125 : f32 to vector<8x256xf32>
    %127 = arith.mulf %126, %24 : vector<8x256xf32>
    %128 = arith.addf %124, %127 : vector<8x256xf32>
    %c3_56 = arith.constant 3 : index
    %c2_57 = arith.constant 2 : index
    %129 = memref.load %arg3[%c3_56, %c2_57] : memref<4x4xf32, #tpu.memory_space<smem>>
    %130 = vector.broadcast %129 : f32 to vector<8x256xf32>
    %131 = arith.mulf %130, %26 : vector<8x256xf32>
    %132 = arith.addf %128, %131 : vector<8x256xf32>
    %c3_58 = arith.constant 3 : index
    %c3_59 = arith.constant 3 : index
    %133 = memref.load %arg3[%c3_58, %c3_59] : memref<4x4xf32, #tpu.memory_space<smem>>
    %134 = vector.broadcast %133 : f32 to vector<8x256xf32>
    %135 = arith.mulf %134, %28 : vector<8x256xf32>
    %136 = arith.addf %132, %135 : vector<8x256xf32>
    %c3_60 = arith.constant 3 : index
    %137 = memref.load %arg4[%c3_60] : memref<4xf32, #tpu.memory_space<smem>>
    %138 = vector.broadcast %137 : f32 to vector<8x256xf32>
    %139 = arith.addf %136, %138 : vector<8x256xf32>
    %c3_61 = arith.constant 3 : index
    %140 = memref.load %arg5[%c3_61] : memref<4xf32, #tpu.memory_space<smem>>
    %141 = vector.broadcast %140 : f32 to vector<8x1xf32>
    %142 = arith.mulf %141, %12 : vector<8x1xf32>
    %143 = vector.broadcast %142 : vector<8x1xf32> to vector<8x256xf32>
    %144 = arith.addf %139, %143 : vector<8x256xf32>
    %145 = vector.broadcast %9 : vector<8x1xf32> to vector<8x256xf32>
    %146 = arith.mulf %144, %145 : vector<8x256xf32>
    %147 = vector.broadcast %6 : vector<8x1xf32> to vector<8x256xf32>
    %148 = arith.mulf %20, %147 : vector<8x256xf32>
    %149 = arith.addf %146, %148 : vector<8x256xf32>
    %c3_62 = arith.constant 3 : index
    %c0_63 = arith.constant 0 : index
    %c0_64 = arith.constant 0 : index
    %150 = vector.load %arg6[%c3_62, %c0_63, %c0_64] : memref<4x8x256xf32, #tpu.memory_space<vmem>>, vector<1x8x256xf32>
    %151 = vector.shape_cast %150 : vector<1x8x256xf32> to vector<8x256xf32>
    %152 = vector.shape_cast %149 : vector<8x256xf32> to vector<1x8x256xf32>
    tpu.vector_store %arg6[%c3_62, %c0_63, %c0_64], %152 {strides = array<i32>} : memref<4x8x256xf32, #tpu.memory_space<vmem>>, vector<1x8x256xf32>,
    return
  }
  func.func @transform_0(%arg0: i32) -> (i32, i32) {
    %c0_i32 = arith.constant 0 : i32
    %c0_i32_0 = arith.constant 0 : i32
    return %arg0, %c0_i32 : i32, i32
  }
  func.func @transform_1(%arg0: i32) -> (i32, i32, i32) {
    %c0_i32 = arith.constant 0 : i32
    %c0_i32_0 = arith.constant 0 : i32
    %c0_i32_1 = arith.constant 0 : i32
    return %c0_i32, %arg0, %c0_i32_0 : i32, i32, i32
  }
  func.func @transform_2(%arg0: i32) -> (i32, i32) {
    %c0_i32 = arith.constant 0 : i32
    %c0_i32_0 = arith.constant 0 : i32
    %c0_i32_1 = arith.constant 0 : i32
    return %c0_i32, %c0_i32_0 : i32, i32
  }
  func.func @transform_3(%arg0: i32) -> i32 {
    %c0_i32 = arith.constant 0 : i32
    %c0_i32_0 = arith.constant 0 : i32
    return %c0_i32 : i32
  }
  func.func @transform_4(%arg0: i32) -> i32 {
    %c0_i32 = arith.constant 0 : i32
    %c0_i32_0 = arith.constant 0 : i32
    return %c0_i32 : i32
  }
  func.func @transform_5(%arg0: i32) -> (i32, i32, i32) {
    %c0_i32 = arith.constant 0 : i32
    %c0_i32_0 = arith.constant 0 : i32
    %c0_i32_1 = arith.constant 0 : i32
    return %c0_i32, %arg0, %c0_i32_0 : i32, i32, i32
  }
}

</mosaic_0001>

<llo_original>
// kernel: tpu_custom_call.1
$region0: #{tpu_custom_call.1}
  #allocation0 [shape = 'u32[]', space=smem, size = 0x4, offset = 0x4, fixed_abs, tag = 'smem constant byte address 0x4 - core index']
  #allocation1 [shape = 'u32[72,128]{1,0:T(1,128)}', space=vmem, size = 0x9000, scoped, tag = 'internal scratch']
  %s0 = inlined_call_operand.vmem [shape: f32[16,1], index: 0, kind: input, shape index: {}]
  %s1 = inlined_call_operand.hbm [shape: f32[4,16,256], index: 1, kind: input, shape index: {}]
  %s2 = inlined_call_operand.vmem [shape: f32[4,4], index: 2, kind: input, shape index: {}]
  %s3 = inlined_call_operand.vmem [shape: f32[4], index: 3, kind: input, shape index: {}]
  %s4 = inlined_call_operand.vmem [shape: f32[4], index: 4, kind: input, shape index: {}]
  %s5 = inlined_call_operand.hbm [shape: f32[4,16,256], index: 5, kind: output, shape index: {}]
  %s6 = sld [smem:[#allocation0]]
  $region69: #{tpu_custom_call.1} parent=0
    _
  %s8 = ssub.s32 1, %s6
  %s9 = scalar_select 0, %s8, %s6
  $region1: #{tpu_custom_call.1} parent=0
    #allocation2 [shape = 'u8[65536]{0}', space=vmem, size = 0x10000, scoped, tag = 'input window, operand 1']
    #allocation3 [shape = 's32[2]{0}', space=sflag, size = 0x8, scoped, tag = 'scoped memory for tpu_custom_call.1']
    #allocation4 [shape = 's32[2]{0}', space=sflag, size = 0x8, scoped, tag = 'scoped memory for tpu_custom_call.1']
    #allocation5 [shape = 's32[2]{0}', space=sflag, size = 0x8, scoped, tag = 'scoped memory for tpu_custom_call.1']
    #allocation6 [shape = 'u8[2048]{0}', space=smem, size = 0x800, scoped, tag = 'input window, operand 2, single buffered']
    #allocation7 [shape = 'u8[512]{0}', space=smem, size = 0x200, scoped, tag = 'input window, operand 3, single buffered']
    #allocation8 [shape = 's32[1]{0}', space=sflag, size = 0x4, scoped, tag = 'scoped memory for tpu_custom_call.1']
    #allocation9 [shape = 'u8[512]{0}', space=smem, size = 0x200, scoped, tag = 'input window, operand 4, single buffered']
    #allocation10 [shape = 'u8[65536]{0}', space=vmem, size = 0x10000, scoped, tag = 'output window, operand 0']
    %10 = vsyncpa [#allocation3], 0
    %s11 = scalar_lea.sflag [#allocation3], 1
    %12 = vsyncpa %s11, 0
    %13 = vsyncpa [#allocation5], 0
    %14 = vsyncpa [#allocation8], 0
    %15 = vsyncpa [#allocation4], 0
    %s16 = scalar_lea.sflag [#allocation4], 1
    %17 = vsyncpa %s16, 0
    loop: start=0, step=1, limit=4
    $region2: #{tpu_custom_call.1} parent=1 // loop_pre_header
      _
    $region3: #{tpu_custom_call.1} parent=1 // loop_header
      %s19 = sphi 0, %s23
      %p20 = scmp.ge.s32.totalorder %s19, 4
      %s29 = sphi 0, %s31
      %s32 = sphi 0, %s29
      %s33 = sphi 0, %s32
      %s49 = sphi 0, %s33
      %s55 = sphi 0, %s57
      %s58 = sphi 0, %s55
      %s59 = sphi 0, %s58
      %s75 = sphi 0, %s59
      %s79 = sphi 0, %s79
      %s81 = sphi 0, %s79
      %s82 = sphi 0, %s81
      %s96 = sphi 0, %s82
      %s100 = sphi 0, %s100
      %s102 = sphi 0, %s100
      %s103 = sphi 0, %s102
      %s117 = sphi 0, %s103
      %s121 = sphi 0, %s121
      %s123 = sphi 0, %s121
      %s124 = sphi 0, %s123
      %s138 = sphi 0, %s124
      %s144 = sphi 0, %s146
      %s147 = sphi 0, %s144
      %s148 = sphi 0, %s147
      %s164 = sphi 0, %s148
    $region4: #{tpu_custom_call.1} parent=1 // loop_header_branch
      %22 = sbr.rel (%p20) target = $region8
    $region5: #{tpu_custom_call.1} parent=1 // loop_body
      %s24 = ssub.s32 %s19, 1
      %s25 = ssub.s32 %s19, 2
      %s26 = sadd.s32 %s19, 1
      %s27 = ssub.s32 %s19, %s26
      %p28 = scmp.eq.s32.totalorder %s27, 0
      %s30 = sadd.s32 %s29, 1
      %s31 = scalar_select %p28, %s29, %s30
      %p34 = pneg %p28
      %p35 = scmp.eq.s32.totalorder %s19, 1
      %p36 = por %p34, %p35
      %p37 = scmp.ne.s32.totalorder %s29, %s32
      %p38 = scmp.eq.s32.totalorder %s19, 0
      %p39 = por %p37, %p38
      %p40 = scmp.ne.s32.totalorder %s29, %s32
      %p41 = scmp.eq.s32.totalorder %s24, 1
      %p42 = por %p40, %p41
      %p43 = scmp.ne.s32.totalorder %s32, %s33
      %p44 = scmp.eq.s32.totalorder %s24, 0
      %p45 = por %p43, %p44
      %p46 = scmp.ne.s32.totalorder %s32, %s33
      %p47 = scmp.eq.s32.totalorder %s25, 1
      %p48 = por %p46, %p47
      %p50 = scmp.ne.s32.totalorder %s33, %s49
      %p51 = scmp.eq.s32.totalorder %s25, 0
      %p52 = por %p50, %p51
      %s53 = ssub.s32 %s19, %s26
      %p54 = scmp.eq.s32.totalorder %s53, 0
      %s56 = sadd.s32 %s55, 1
      %s57 = scalar_select %p54, %s55, %s56
      %p60 = pneg %p54
      %p61 = scmp.eq.s32.totalorder %s19, 1
      %p62 = por %p60, %p61
      %p63 = scmp.ne.s32.totalorder %s55, %s58
      %p64 = scmp.eq.s32.totalorder %s19, 0
      %p65 = por %p63, %p64
      %p66 = scmp.ne.s32.totalorder %s55, %s58
      %p67 = scmp.eq.s32.totalorder %s24, 1
      %p68 = por %p66, %p67
      %p69 = scmp.ne.s32.totalorder %s58, %s59
      %p70 = scmp.eq.s32.totalorder %s24, 0
      %p71 = por %p69, %p70
      %p72 = scmp.ne.s32.totalorder %s58, %s59
      %p73 = scmp.eq.s32.totalorder %s25, 1
      %p74 = por %p72, %p73
      %p76 = scmp.ne.s32.totalorder %s59, %s75
      %p77 = scmp.eq.s32.totalorder %s25, 0
      %p78 = por %p76, %p77
      %s80 = sadd.s32 %s79, 1
      %p83 = scmp.eq.s32.totalorder %s19, 1
      %p84 = scmp.ne.s32.totalorder %s79, %s81
      %p85 = scmp.eq.s32.totalorder %s19, 0
      %p86 = por %p84, %p85
      %p87 = scmp.ne.s32.totalorder %s79, %s81
      %p88 = scmp.eq.s32.totalorder %s24, 1
      %p89 = por %p87, %p88
      %p90 = scmp.ne.s32.totalorder %s81, %s82
      %p91 = scmp.eq.s32.totalorder %s24, 0
      %p92 = por %p90, %p91
      %p93 = scmp.ne.s32.totalorder %s81, %s82
      %p94 = scmp.eq.s32.totalorder %s25, 1
      %p95 = por %p93, %p94
      %p97 = scmp.ne.s32.totalorder %s82, %s96
      %p98 = scmp.eq.s32.totalorder %s25, 0
      %p99 = por %p97, %p98
      %s101 = sadd.s32 %s100, 1
      %p104 = scmp.eq.s32.totalorder %s19, 1
      %p105 = scmp.ne.s32.totalorder %s100, %s102
      %p106 = scmp.eq.s32.totalorder %s19, 0
      %p107 = por %p105, %p106
      %p108 = scmp.ne.s32.totalorder %s100, %s102
      %p109 = scmp.eq.s32.totalorder %s24, 1
      %p110 = por %p108, %p109
      %p111 = scmp.ne.s32.totalorder %s102, %s103
      %p112 = scmp.eq.s32.totalorder %s24, 0
      %p113 = por %p111, %p112
      %p114 = scmp.ne.s32.totalorder %s102, %s103
      %p115 = scmp.eq.s32.totalorder %s25, 1
      %p116 = por %p114, %p115
      %p118 = scmp.ne.s32.totalorder %s103, %s117
      %p119 = scmp.eq.s32.totalorder %s25, 0
      %p120 = por %p118, %p119
      %s122 = sadd.s32 %s121, 1
      %p125 = scmp.eq.s32.totalorder %s19, 1
      %p126 = scmp.ne.s32.totalorder %s121, %s123
      %p127 = scmp.eq.s32.totalorder %s19, 0
      %p128 = por %p126, %p127
      %p129 = scmp.ne.s32.totalorder %s121, %s123
      %p130 = scmp.eq.s32.totalorder %s24, 1
      %p131 = por %p129, %p130
      %p132 = scmp.ne.s32.totalorder %s123, %s124
      %p133 = scmp.eq.s32.totalorder %s24, 0
      %p134 = por %p132, %p133
      %p135 = scmp.ne.s32.totalorder %s123, %s124
      %p136 = scmp.eq.s32.totalorder %s25, 1
      %p137 = por %p135, %p136
      %p139 = scmp.ne.s32.totalorder %s124, %s138
      %p140 = scmp.eq.s32.totalorder %s25, 0
      %p141 = por %p139, %p140
      %s142 = ssub.s32 %s19, %s26
      %p143 = scmp.eq.s32.totalorder %s142, 0
      %s145 = sadd.s32 %s144, 1
      %s146 = scalar_select %p143, %s144, %s145
      %p149 = pneg %p143
      %p150 = scmp.eq.s32.totalorder %s19, 1
      %p151 = por %p149, %p150
      %p152 = scmp.ne.s32.totalorder %s144, %s147
      %p153 = scmp.eq.s32.totalorder %s19, 0
      %p154 = por %p152, %p153
      %p155 = scmp.ne.s32.totalorder %s144, %s147
      %p156 = scmp.eq.s32.totalorder %s24, 1
      %p157 = por %p155, %p156
      %p158 = scmp.ne.s32.totalorder %s147, %s148
      %p159 = scmp.eq.s32.totalorder %s24, 0
      %p160 = por %p158, %p159
      %p161 = scmp.ne.s32.totalorder %s147, %s148
      %p162 = scmp.eq.s32.totalorder %s25, 1
      %p163 = por %p161, %p162
      %p165 = scmp.ne.s32.totalorder %s148, %s164
      %p166 = scmp.eq.s32.totalorder %s25, 0
      %p167 = por %p165, %p166
      %p168 = scmp.le.s32.totalorder 1, %s19
      %p169 = scmp.lt.s32.totalorder %s19, 3
      %p170 = pnand %p168, %p169
      %p171 = pneg %p170
      // Predicated region
      $region9: #{tpu_custom_call.1} parent=5 // pred_check
        _
      $region10: #{tpu_custom_call.1} parent=5 // pred_check_branch
        %173 = sbr.rel (%p170) target = $region12
      $region11: #{tpu_custom_call.1} parent=5 // pred_region
        %s174 = ssub.s32 %s19, 1
        // Predicated region
        $region13: #{tpu_custom_call.1} parent=11 // pred_check
          %p175 = pneg %p92
        $region14: #{tpu_custom_call.1} parent=11 // pred_check_branch
          %177 = sbr.rel (%p175) target = $region16
        $region15: #{tpu_custom_call.1} parent=11 // pred_region
          %179 = vsyncadd [#allocation5], 0
          %s181 = sshll.u32 %s2, 4
          %s182 = int_to_ptr.vmem [resolvable:$true] %s181
          %184 = dma.vmem_to_smem %s182, 64, [#allocation6], [#allocation5]
        $region16: #{tpu_custom_call.1} parent=11 // pred_fallthru
          _
        // Predicated region
        $region17: #{tpu_custom_call.1} parent=11 // pred_check
          %p185 = pneg %p113
        $region18: #{tpu_custom_call.1} parent=11 // pred_check_branch
          %187 = sbr.rel (%p185) target = $region20
        $region19: #{tpu_custom_call.1} parent=11 // pred_region
          %189 = vsyncadd [#allocation8], 0
          %s191 = sshll.u32 %s3, 4
          %s192 = int_to_ptr.vmem [resolvable:$true] %s191
          %194 = dma.vmem_to_smem %s192, 16, [#allocation7], [#allocation8]
        $region20: #{tpu_custom_call.1} parent=11 // pred_fallthru
          _
        // Predicated region
        $region21: #{tpu_custom_call.1} parent=11 // pred_check
          %p195 = pneg %p134
        $region22: #{tpu_custom_call.1} parent=11 // pred_check_branch
          %197 = sbr.rel (%p195) target = $region24
        $region23: #{tpu_custom_call.1} parent=11 // pred_region
          %199 = vsyncadd [#allocation8], 0
          %s201 = sshll.u32 %s4, 4
          %s202 = int_to_ptr.vmem [resolvable:$true] %s201
          %204 = dma.vmem_to_smem %s202, 16, [#allocation9], [#allocation8]
        $region24: #{tpu_custom_call.1} parent=11 // pred_fallthru
          _
      $region12: #{tpu_custom_call.1} parent=5 // pred_fallthru
        _
      %p205 = scmp.lt.s32.totalorder %s19, 2
      // Predicated region
      $region25: #{tpu_custom_call.1} parent=5 // pred_check
        %p206 = pneg %p205
      $region26: #{tpu_custom_call.1} parent=5 // pred_check_branch
        %208 = sbr.rel (%p206) target = $region28
      $region27: #{tpu_custom_call.1} parent=5 // pred_region
        // Predicated region
        $region29: #{tpu_custom_call.1} parent=27 // pred_check
          %p209 = pneg %p39
        $region30: #{tpu_custom_call.1} parent=27 // pred_check_branch
          %211 = sbr.rel (%p209) target = $region32
        $region31: #{tpu_custom_call.1} parent=27 // pred_region
          %p212 = scmp.lt.s32.totalorder %s19, 1
          %s213 = scalar_select %p212, %s19, 1
          %s214 = smul.addr %s213, 8
          %s215 = scalar_lea.vmem %s0, %s214
        $region32: #{tpu_custom_call.1} parent=27 // pred_fallthru
          _
        // Predicated region
        $region33: #{tpu_custom_call.1} parent=27 // pred_check
          %p216 = pneg %p65
        $region34: #{tpu_custom_call.1} parent=27 // pred_check_branch
          %218 = sbr.rel (%p216) target = $region36
        $region35: #{tpu_custom_call.1} parent=27 // pred_region
          %s219 = sand.u32 %s55, 1
          %s220 = scalar_lea.sflag [#allocation3], %s219
          %s221 = sand.u32 %s55, 1
          %s222 = smul.addr %s221, 64
          %s223 = scalar_lea.vmem [#allocation2], %s222
          %225 = vsyncadd %s220, 0
          %s226 = smul.addr %s19, 2
          %s227 = smul.addr %s226, 8
          %s228 = scalar_lea.hbm %s1, %s227
          %s229 = sshll.u32 %s228, 4
          %s230 = int_to_ptr.hbm [resolvable:$true] %s229
          %s231 = sshll.u32 %s223, 4
          %s232 = int_to_ptr.vmem [resolvable:$true] %s231
          %237 = dma.hbm_to_vmem [thread:$0]  %s230, 1024, %s232, %s220, 512, 256, 16
        $region36: #{tpu_custom_call.1} parent=27 // pred_fallthru
          _
      $region28: #{tpu_custom_call.1} parent=5 // pred_fallthru
        _
      %p238 = scmp.le.s32.totalorder 1, %s19
      %p239 = scmp.lt.s32.totalorder %s19, 3
      %p240 = pnand %p238, %p239
      %p241 = pneg %p240
      // Predicated region
      $region37: #{tpu_custom_call.1} parent=5 // pred_check
        _
      $region38: #{tpu_custom_call.1} parent=5 // pred_check_branch
        %243 = sbr.rel (%p240) target = $region40
      $region39: #{tpu_custom_call.1} parent=5 // pred_region
        %s244 = ssub.s32 %s19, 1
        %s245 = sand.u32 %s58, 1
        %s246 = scalar_lea.sflag [#allocation3], %s245
        %s247 = sand.u32 %s58, 1
        %s248 = smul.addr %s247, 64
        %s249 = scalar_lea.vmem [#allocation2], %s248
        // Predicated region
        $region41: #{tpu_custom_call.1} parent=39 // pred_check
          %p250 = pneg %p71
        $region42: #{tpu_custom_call.1} parent=39 // pred_check_branch
          %252 = sbr.rel (%p250) target = $region44
        $region43: #{tpu_custom_call.1} parent=39 // pred_region
          %254 = dma.done %s246, 1024
        $region44: #{tpu_custom_call.1} parent=39 // pred_fallthru
          _
        // Predicated region
        $region45: #{tpu_custom_call.1} parent=39 // pred_check
          %p255 = pneg %p92
        $region46: #{tpu_custom_call.1} parent=39 // pred_check_branch
          %257 = sbr.rel (%p255) target = $region48
        $region47: #{tpu_custom_call.1} parent=39 // pred_region
          %259 = dma.done [#allocation5], 64
        $region48: #{tpu_custom_call.1} parent=39 // pred_fallthru
          _
        // Predicated region
        $region49: #{tpu_custom_call.1} parent=39 // pred_check
          %p260 = pneg %p113
        $region50: #{tpu_custom_call.1} parent=39 // pred_check_branch
          %262 = sbr.rel (%p260) target = $region52
        $region51: #{tpu_custom_call.1} parent=39 // pred_region
          %264 = dma.done [#allocation8], 16
        $region52: #{tpu_custom_call.1} parent=39 // pred_fallthru
          _
        // Predicated region
        $region53: #{tpu_custom_call.1} parent=39 // pred_check
          %p265 = pneg %p134
        $region54: #{tpu_custom_call.1} parent=39 // pred_check_branch
          %267 = sbr.rel (%p265) target = $region56
        $region55: #{tpu_custom_call.1} parent=39 // pred_region
          %269 = dma.done [#allocation8], 16
        $region56: #{tpu_custom_call.1} parent=39 // pred_fallthru
          _
        %270 = sfence
        %p271 = scmp.lt.s32.totalorder %s24, 1
        %s272 = scalar_select %p271, %s24, 1
        %s273 = smul.addr %s272, 8
        %s274 = scalar_lea.vmem %s0, %s273
        %p275 = pneg %p45
        %p276 = pneg %p42
        %s277 = sand.u32 %s58, 1
        %s278 = scalar_lea.sflag [#allocation3], %s277
        %s279 = sand.u32 %s58, 1
        %s280 = smul.addr %s279, 64
        %s281 = scalar_lea.vmem [#allocation2], %s280
        %p282 = pneg %p71
        %p283 = pneg %p68
        %p284 = pneg %p92
        %p285 = pneg %p89
        %p286 = pneg %p113
        %p287 = pneg %p110
        %p288 = pneg %p134
        %p289 = pneg %p131
        %p290 = pneg %p160
        %p291 = pneg %p157
        %s292 = sand.u32 %s147, 1
        %s293 = scalar_lea.sflag [#allocation4], %s292
        %s294 = sand.u32 %s147, 1
        %s295 = smul.addr %s294, 64
        %s296 = scalar_lea.vmem [#allocation10], %s295
        %p297 = scmp.lt.s32.totalorder %s24, 1
        %s298 = scalar_select %p297, %s24, 1
        %s299 = smul.addr %s298, 8
        %s300 = scalar_lea.vmem %s0, %s299
        %v301 = vld [vmem:[%s300] sm:$0xff]
        %v302 = vmul.f32 %v301, %v301
        %v303 = vadd.f32 %v302, 1.0
        %v304 = vrsqrt.pop %v303
        %v305 = vmul.f32 %v304, %v303
        %v306 = vmul.f32 %v305, %v304
        %v307 = vmul.f32 0.5, %v306
        %v308 = vsub.f32 1.5, %v307
        %v309 = vmul.f32 %v304, %v308
        %vm310 = vweird.f32 %v303
        %vm311 = vweird.f32 %v304
        %vm312 = vmor %vm310, %vm311
        %v313 = vsel %vm312, %v304, %v309
        %v314 = vrcp.pop %v303
        %v315 = vmul.f32 %v303, %v314
        %v316 = vsub.f32 1.0, %v315
        %v317 = vmul.f32 %v314, %v316
        %v318 = vadd.f32 %v314, %v317
        %vm319 = vweird.f32 %v303
        %vm320 = vweird.f32 %v314
        %vm321 = vmor %vm319, %vm320
        %v322 = vsel %vm321, %v314, %v318
        %v323 = vand.u32 2147483647, %v303
        %vm324 = vcmp.eq.f32.partialorder %v323, 8.507059e+37
        %v325 = vand.u32 %v303, 2147483648
        %v326 = vor.u32 1.1754944e-38, %v325
        %v327 = vsel %vm324, %v326, %v322
        %v328 = vmul.f32 1.0, %v327
        %v329 = vsub.f32 0.0, %v301
        %v330 = vmul.f32 %v329, %v313
        %v331 = vlog2.pop %v301
        %v332 = vmul.f32 %v331, 0.6931472
        %v333 = vmul.f32 %v332, 0.25
        %v334 = vld [vmem:[%s249] sm:$0xff]
        %v335 = vld [vmem:[%s249 + $0x8] sm:$0xff]
        %s336 = scalar_lea.vmem %s249, 16 [#allocation2]
        %v337 = vld [vmem:[%s336] sm:$0xff]
        %v338 = vld [vmem:[%s336 + $0x8] sm:$0xff]
        %s339 = scalar_lea.vmem %s249, 32 [#allocation2]
        %v340 = vld [vmem:[%s339] sm:$0xff]
        %v341 = vld [vmem:[%s339 + $0x8] sm:$0xff]
        %s342 = scalar_lea.vmem %s249, 48 [#allocation2]
        %v343 = vld [vmem:[%s342] sm:$0xff]
        %v344 = vld [vmem:[%s342 + $0x8] sm:$0xff]
        %346 = vset.pattern.permute.xlu0 0
        %347 = vperm.xlu0 %346, %v313
        %v348 = vpop.permute.xlu0 %347
        %v350 = vmul.f32 %v334, %v348
        %v351 = vmul.f32 %v335, %v348
        %v352 = vmul.f32 %v337, %v348
        %v353 = vmul.f32 %v338, %v348
        %v354 = vmul.f32 %v340, %v348
        %v355 = vmul.f32 %v341, %v348
        %v356 = vmul.f32 %v343, %v348
        %v357 = vmul.f32 %v344, %v348
        %s358 = sld [smem:[#allocation6]]
        %v359 = vstv %s358
        %v360 = vmul.f32 %v359, %v350
        %v361 = vmul.f32 %v359, %v351
        %s362 = sld [smem:[#allocation6 + $0x1]]
        %v363 = vstv %s362
        %v364 = vmul.f32 %v363, %v352
        %v365 = vmul.f32 %v363, %v353
        %v366 = vadd.f32 %v360, %v364
        %v367 = vadd.f32 %v361, %v365
        %s368 = sld [smem:[#allocation6 + $0x2]]
        %v369 = vstv %s368
        %v370 = vmul.f32 %v369, %v354
        %v371 = vmul.f32 %v369, %v355
        %v372 = vadd.f32 %v366, %v370
        %v373 = vadd.f32 %v367, %v371
        %s374 = sld [smem:[#allocation6 + $0x3]]
        %v375 = vstv %s374
        %v376 = vmul.f32 %v375, %v356
        %v377 = vmul.f32 %v375, %v357
        %v378 = vadd.f32 %v372, %v376
        %v379 = vadd.f32 %v373, %v377
        %s380 = sld [smem:[#allocation7]]
        %v381 = vstv %s380
        %v382 = vadd.f32 %v378, %v381
        %v383 = vadd.f32 %v379, %v381
        %s384 = sld [smem:[#allocation9]]
        %v385 = vstv %s384
        %v386 = vmul.f32 %v385, %v333
        %388 = vset.pattern.permute.xlu0 0
        %389 = vperm.xlu0 %388, %v386
        %v390 = vpop.permute.xlu0 %389
        %v392 = vadd.f32 %v382, %v390
        %v393 = vadd.f32 %v383, %v390
        %395 = vset.pattern.permute.xlu0 0
        %396 = vperm.xlu0 %395, %v330
        %v397 = vpop.permute.xlu0 %396
        %v399 = vmul.f32 %v392, %v397
        %v400 = vmul.f32 %v393, %v397
        %402 = vset.pattern.permute.xlu0 0
        %403 = vperm.xlu0 %402, %v328
        %v404 = vpop.permute.xlu0 %403
        %v406 = vmul.f32 %v334, %v404
        %v407 = vmul.f32 %v335, %v404
        %v408 = vadd.f32 %v399, %v406
        %v409 = vadd.f32 %v400, %v407
        %410 = vst [vmem:[%s296] sm:$0xff] %v408
        %411 = vst [vmem:[%s296 + $0x8] sm:$0xff] %v409
        %s412 = sld [smem:[#allocation6 + $0x80]]
        %v413 = vstv %s412
        %v414 = vmul.f32 %v413, %v350
        %v415 = vmul.f32 %v413, %v351
        %s416 = sld [smem:[#allocation6 + $0x81]]
        %v417 = vstv %s416
        %v418 = vmul.f32 %v417, %v352
        %v419 = vmul.f32 %v417, %v353
        %v420 = vadd.f32 %v414, %v418
        %v421 = vadd.f32 %v415, %v419
        %s422 = sld [smem:[#allocation6 + $0x82]]
        %v423 = vstv %s422
        %v424 = vmul.f32 %v423, %v354
        %v425 = vmul.f32 %v423, %v355
        %v426 = vadd.f32 %v420, %v424
        %v427 = vadd.f32 %v421, %v425
        %s428 = sld [smem:[#allocation6 + $0x83]]
        %v429 = vstv %s428
        %v430 = vmul.f32 %v429, %v356
        %v431 = vmul.f32 %v429, %v357
        %v432 = vadd.f32 %v426, %v430
        %v433 = vadd.f32 %v427, %v431
        %s434 = sld [smem:[#allocation7 + $0x1]]
        %v435 = vstv %s434
        %v436 = vadd.f32 %v432, %v435
        %v437 = vadd.f32 %v433, %v435
        %s438 = sld [smem:[#allocation9 + $0x1]]
        %v439 = vstv %s438
        %v440 = vmul.f32 %v439, %v333
        %442 = vset.pattern.permute.xlu0 0
        %443 = vperm.xlu0 %442, %v440
        %v444 = vpop.permute.xlu0 %443
        %v446 = vadd.f32 %v436, %v444
        %v447 = vadd.f32 %v437, %v444
        %v448 = vmul.f32 %v446, %v397
        %v449 = vmul.f32 %v447, %v397
        %v450 = vmul.f32 %v337, %v404
        %v451 = vmul.f32 %v338, %v404
        %v452 = vadd.f32 %v448, %v450
        %v453 = vadd.f32 %v449, %v451
        %s454 = scalar_lea.vmem %s296, 16 [#allocation10]
        %455 = vst [vmem:[%s454] sm:$0xff] %v452
        %456 = vst [vmem:[%s454 + $0x8] sm:$0xff] %v453
        %s457 = sld [smem:[#allocation6 + $0x100]]
        %v458 = vstv %s457
        %v459 = vmul.f32 %v458, %v350
        %v460 = vmul.f32 %v458, %v351
        %s461 = sld [smem:[#allocation6 + $0x101]]
        %v462 = vstv %s461
        %v463 = vmul.f32 %v462, %v352
        %v464 = vmul.f32 %v462, %v353
        %v465 = vadd.f32 %v459, %v463
        %v466 = vadd.f32 %v460, %v464
        %s467 = sld [smem:[#allocation6 + $0x102]]
        %v468 = vstv %s467
        %v469 = vmul.f32 %v468, %v354
        %v470 = vmul.f32 %v468, %v355
        %v471 = vadd.f32 %v465, %v469
        %v472 = vadd.f32 %v466, %v470
        %s473 = sld [smem:[#allocation6 + $0x103]]
        %v474 = vstv %s473
        %v475 = vmul.f32 %v474, %v356
        %v476 = vmul.f32 %v474, %v357
        %v477 = vadd.f32 %v471, %v475
        %v478 = vadd.f32 %v472, %v476
        %s479 = sld [smem:[#allocation7 + $0x2]]
        %v480 = vstv %s479
        %v481 = vadd.f32 %v477, %v480
        %v482 = vadd.f32 %v478, %v480
        %s483 = sld [smem:[#allocation9 + $0x2]]
        %v484 = vstv %s483
        %v485 = vmul.f32 %v484, %v333
        %487 = vset.pattern.permute.xlu0 0
        %488 = vperm.xlu0 %487, %v485
        %v489 = vpop.permute.xlu0 %488
        %v491 = vadd.f32 %v481, %v489
        %v492 = vadd.f32 %v482, %v489
        %v493 = vmul.f32 %v491, %v397
        %v494 = vmul.f32 %v492, %v397
        %v495 = vmul.f32 %v340, %v404
        %v496 = vmul.f32 %v341, %v404
        %v497 = vadd.f32 %v493, %v495
        %v498 = vadd.f32 %v494, %v496
        %s499 = scalar_lea.vmem %s296, 32 [#allocation10]
        %500 = vst [vmem:[%s499] sm:$0xff] %v497
        %501 = vst [vmem:[%s499 + $0x8] sm:$0xff] %v498
        %s502 = sld [smem:[#allocation6 + $0x180]]
        %v503 = vstv %s502
        %v504 = vmul.f32 %v503, %v350
        %v505 = vmul.f32 %v503, %v351
        %s506 = sld [smem:[#allocation6 + $0x181]]
        %v507 = vstv %s506
        %v508 = vmul.f32 %v507, %v352
        %v509 = vmul.f32 %v507, %v353
        %v510 = vadd.f32 %v504, %v508
        %v511 = vadd.f32 %v505, %v509
        %s512 = sld [smem:[#allocation6 + $0x182]]
        %v513 = vstv %s512
        %v514 = vmul.f32 %v513, %v354
        %v515 = vmul.f32 %v513, %v355
        %v516 = vadd.f32 %v510, %v514
        %v517 = vadd.f32 %v511, %v515
        %s518 = sld [smem:[#allocation6 + $0x183]]
        %v519 = vstv %s518
        %v520 = vmul.f32 %v519, %v356
        %v521 = vmul.f32 %v519, %v357
        %v522 = vadd.f32 %v516, %v520
        %v523 = vadd.f32 %v517, %v521
        %s524 = sld [smem:[#allocation7 + $0x3]]
        %v525 = vstv %s524
        %v526 = vadd.f32 %v522, %v525
        %v527 = vadd.f32 %v523, %v525
        %s528 = sld [smem:[#allocation9 + $0x3]]
        %v529 = vstv %s528
        %v530 = vmul.f32 %v529, %v333
        %532 = vset.pattern.permute.xlu0 0
        %533 = vperm.xlu0 %532, %v530
        %v534 = vpop.permute.xlu0 %533
        %v536 = vadd.f32 %v526, %v534
        %v537 = vadd.f32 %v527, %v534
        %v538 = vmul.f32 %v536, %v397
        %v539 = vmul.f32 %v537, %v397
        %v540 = vmul.f32 %v343, %v404
        %v541 = vmul.f32 %v344, %v404
        %v542 = vadd.f32 %v538, %v540
        %v543 = vadd.f32 %v539, %v541
        %s544 = scalar_lea.vmem %s296, 48 [#allocation10]
        %545 = vst [vmem:[%s544] sm:$0xff] %v542
        %546 = vst [vmem:[%s544 + $0x8] sm:$0xff] %v543
        %s547 = sand.u32 %s147, 1
        %s548 = scalar_lea.sflag [#allocation4], %s547
        %s549 = sand.u32 %s147, 1
        %s550 = smul.addr %s549, 64
        %s551 = scalar_lea.vmem [#allocation10], %s550
        // Predicated region
        $region57: #{tpu_custom_call.1} parent=39 // pred_check
          %p552 = pneg %p157
        $region58: #{tpu_custom_call.1} parent=39 // pred_check_branch
          %554 = sbr.rel (%p552) target = $region60
        $region59: #{tpu_custom_call.1} parent=39 // pred_region
          %556 = vsyncadd %s548, 0
          %s557 = smul.addr %s24, 2
          %s558 = smul.addr %s557, 8
          %s559 = scalar_lea.hbm %s5, %s558
          %s560 = sshll.u32 %s551, 4
          %s561 = int_to_ptr.vmem [resolvable:$true] %s560
          %s562 = sshll.u32 %s559, 4
          %s563 = int_to_ptr.hbm [resolvable:$true] %s562
          %568 = dma.vmem_to_hbm [thread:$0]  %s561, 1024, %s563, %s548, 256, 512, 16
        $region60: #{tpu_custom_call.1} parent=39 // pred_fallthru
          _
      $region40: #{tpu_custom_call.1} parent=5 // pred_fallthru
        _
      %p569 = scmp.le.s32.totalorder 2, %s19
      // Predicated region
      $region61: #{tpu_custom_call.1} parent=5 // pred_check
        %p570 = pneg %p569
      $region62: #{tpu_custom_call.1} parent=5 // pred_check_branch
        %572 = sbr.rel (%p570) target = $region64
      $region63: #{tpu_custom_call.1} parent=5 // pred_region
        %s573 = ssub.s32 %s19, 2
        // Predicated region
        $region65: #{tpu_custom_call.1} parent=63 // pred_check
          %p574 = pneg %p163
        $region66: #{tpu_custom_call.1} parent=63 // pred_check_branch
          %576 = sbr.rel (%p574) target = $region68
        $region67: #{tpu_custom_call.1} parent=63 // pred_region
          %s577 = sand.u32 %s148, 1
          %s578 = scalar_lea.sflag [#allocation4], %s577
          %s579 = sand.u32 %s148, 1
          %s580 = smul.addr %s579, 64
          %s581 = scalar_lea.vmem [#allocation10], %s580
          %583 = dma.done %s578, 1024
        $region68: #{tpu_custom_call.1} parent=63 // pred_fallthru
          _
      $region64: #{tpu_custom_call.1} parent=5 // pred_fallthru
        _
    $region6: #{tpu_custom_call.1} parent=1 // loop_footer
      %s23 = sadd.s32 1, %s19
    $region7: #{tpu_custom_call.1} parent=1 // loop_footer_branch
      %18 = sbr.rel target = $region3
    $region8: #{tpu_custom_call.1} parent=1 // loop_exit
      _
    %584 = vsyncpa [#allocation3], 1
    %s585 = scalar_lea.sflag [#allocation3], 1
    %586 = vsyncpa %s585, 1
    %587 = vsyncpa [#allocation4], 1
    %s588 = scalar_lea.sflag [#allocation4], 1
    %589 = vsyncpa %s588, 1
    %590 = vsyncpa [#allocation5], 1
    %s591 = scalar_lea.sflag [#allocation5], 1
    %592 = vsyncpa %s591, 1
    %593 = vsyncpa [#allocation8], 1

</llo_original>
